<compile_context>
chip_gen: v5e
topology: v5e:2x2
jax: 0.10.0
libtpu: 0.0.40
codegen_flags: <defaults>
</compile_context>

<pallas_src>
import functools

import jax
import jax.numpy as jnp
from jax.experimental import pallas as pl
from jax.experimental.pallas import tpu as pltpu


def _se_gate_kernel(x_ref, w1_ref, w2_ref, o_ref, *, bt, inv_hw):
    # x_ref:  (BT, C, HWp)  BT batch elements, spatial flattened on the lane axis
    # w1_ref: (hidden, C)   PyTorch nn.Linear layout, passed through untransposed
    # w2_ref: (C, hidden)
    # o_ref:  (BT, C, HWp)
    w1 = w1_ref[...]
    w2 = w2_ref[...]
    for b in range(bt):  # static unroll; BT is small and compile-time
        xb = x_ref[b]                                                        # (C, HWp)
        # Squeeze: global average pool (f32 accumulation).  Padded lanes are
        # zero, so summing over HWp and dividing by the true HW is exact.
        y = jnp.sum(xb.astype(jnp.float32), axis=-1, keepdims=True) * inv_hw  # (C, 1)
        # Excitation as column matvecs in the PyTorch weight layout:
        # no lane<->sublane transposes anywhere.
        h = jnp.maximum(
            jnp.dot(w1, y, preferred_element_type=jnp.float32), 0.0)          # (hidden, 1)
        g = jax.nn.sigmoid(
            jnp.dot(w2, h, preferred_element_type=jnp.float32))               # (C, 1)
        # Scale: per-channel gate broadcast along the lane (spatial) axis.
        o_ref[b] = (xb.astype(jnp.float32) * g).astype(o_ref.dtype)


def se_layer(x, w1, w2, *, max_block_bytes=4 * 1024 * 1024):
    """x: (B, C, H, W); w1: (hidden, C); w2: (C, hidden) (PyTorch Linear layout, no bias)."""
    B, C, H, W = x.shape
    hidden = w1.shape[0]
    HW = H * W
    HWp = ((HW + 127) // 128) * 128            # lane-dense (multiple-of-128) last dim

    x_flat = x.reshape(B, C, HW)
    if HWp != HW:
        x_flat = jnp.pad(x_flat, ((0, 0), (0, 0), (0, HWp - HW)))

    # Batch tile: keep >= 2 grid steps (v7x has 2 TensorCores) while amortizing
    # per-step overhead for larger B; cap by a per-block VMEM budget.
    itemsize = jnp.dtype(x.dtype).itemsize
    per_elem_bytes = C * HWp * itemsize
    bt_vmem_cap = max(1, max_block_bytes // per_elem_bytes)
    bt_target = max(1, B // 2)
    cap = max(1, min(bt_vmem_cap, bt_target, B))
    bt = 1
    for d in range(1, cap + 1):                # largest divisor of B <= cap
        if B % d == 0:
            bt = d
    grid = (B // bt,)
    # TODO(synk): for feature maps so large that even BT=1 exceeds the per-block
    # budget, a second grid axis tiling HW (two-pass reduce/scale) would be
    # needed; not required for ResNet-scale shapes.

    kernel = functools.partial(_se_gate_kernel, bt=bt, inv_hw=float(1.0 / HW))

    out_flat = pl.pallas_call(
        kernel,
        out_shape=jax.ShapeDtypeStruct((B, C, HWp), x.dtype),
        grid_spec=pltpu.PrefetchScalarGridSpec(
            num_scalar_prefetch=0,
            grid=grid,
            in_specs=[
                pl.BlockSpec((bt, C, HWp), lambda i: (i, 0, 0)),
                pl.BlockSpec((hidden, C), lambda i: (0, 0)),
                pl.BlockSpec((C, hidden), lambda i: (0, 0)),
            ],
            out_specs=pl.BlockSpec((bt, C, HWp), lambda i: (i, 0, 0)),
        ),
        compiler_params=pltpu.CompilerParams(
            dimension_semantics=("parallel",),
            vmem_limit_bytes=32 * 1024 * 1024,
        ),
    )(x_flat, jnp.asarray(w1), jnp.asarray(w2))

    out = out_flat[:, :, :HW].reshape(B, C, H, W)
    return out


if __name__ == "__main__":
    # Config consistent with the module's channel-attention blocks:
    # C=64, reduction=16 -> hidden = max(64 // 16, 16) = 16.
    B, C, H, W = 2, 64, 16, 16
    hidden = 16

    key = jax.random.PRNGKey(0)
    kx, k1, k2 = jax.random.split(key, 3)

    x = jax.random.normal(kx, (B, C, H, W), dtype=jnp.float32)
    # PyTorch nn.Linear weight shapes: fc1 (hidden, C), fc2 (C, hidden); no biases.
    w1 = jax.random.normal(k1, (hidden, C), dtype=jnp.float32) * 0.1
    w2 = jax.random.normal(k2, (C, hidden), dtype=jnp.float32) * 0.1

    out = se_layer(x, w1, w2)
    jax.block_until_ready(out)

    # Reference check in plain JAX (same math path).
    y = x.mean(axis=(2, 3))                              # (B, C)
    h = jnp.maximum(y @ w1.T, 0.0)                       # (B, hidden)
    s = jax.nn.sigmoid(h @ w2.T)                         # (B, C)
    ref = x * s[:, :, None, None]
    assert jnp.allclose(out, ref, atol=1e-5, rtol=1e-5), "mismatch vs reference"

    print("KERNEL_OK")
</pallas_src>

<mosaic_0001>
module attributes {stable_mosaic.version = 11 : i64} {
  func.func @_se_gate_kernel(%arg0: i32, %arg1: memref<1x64x256xf32, #tpu.memory_space<vmem>>, %arg2: memref<16x64xf32, #tpu.memory_space<vmem>>, %arg3: memref<64x16xf32, #tpu.memory_space<vmem>>, %arg4: memref<1x64x256xf32, #tpu.memory_space<vmem>>) attributes {dimension_semantics = [#tpu.dimension_semantics<parallel>], iteration_bounds = array<i64: 2>, scalar_prefetch = 0 : i64, scratch_operands = 0 : i64, tpu.core_type = #tpu.core_type<tc>, window_params = [{transform_indices = @transform_0, window_bounds = array<i64: 1, 64, 256>}, {pipeline_mode = #tpu.pipeline_mode<synchronous>, transform_indices = @transform_1, window_bounds = array<i64: 16, 64>}, {pipeline_mode = #tpu.pipeline_mode<synchronous>, transform_indices = @transform_2, window_bounds = array<i64: 64, 16>}, {transform_indices = @transform_3, window_bounds = array<i64: 1, 64, 256>}]} {
    %c0 = arith.constant 0 : index
    %c0_0 = arith.constant 0 : index
    %0 = vector.load %arg2[%c0, %c0_0] : memref<16x64xf32, #tpu.memory_space<vmem>>, vector<16x64xf32>
    %c0_1 = arith.constant 0 : index
    %c0_2 = arith.constant 0 : index
    %1 = vector.load %arg3[%c0_1, %c0_2] : memref<64x16xf32, #tpu.memory_space<vmem>>, vector<64x16xf32>
    %c0_3 = arith.constant 0 : index
    %c0_4 = arith.constant 0 : index
    %c0_5 = arith.constant 0 : index
    %2 = vector.load %arg1[%c0_3, %c0_4, %c0_5] : memref<1x64x256xf32, #tpu.memory_space<vmem>>, vector<1x64x256xf32>
    %3 = vector.shape_cast %2 : vector<1x64x256xf32> to vector<64x256xf32>
    %cst = arith.constant dense<0.000000e+00> : vector<64xf32>
    %4 = vector.multi_reduction <add>, %3, %cst [1] : vector<64x256xf32> to vector<64xf32>
    %5 = vector.shape_cast %4 : vector<64xf32> to vector<64x1xf32>
    %cst_6 = arith.constant 3.906250e-03 : f32
    %6 = vector.broadcast %cst_6 : f32 to vector<64x1xf32>
    %7 = arith.mulf %5, %6 : vector<64x1xf32>
    %cst_7 = arith.constant dense<0.000000e+00> : vector<16x1xf32>
    %8 = tpu.matmul %0, %7, %cst_7 {dimension_numbers = #tpu.dot_dimension_numbers<[1], [0], [0], [1], [0, 0, 1, 1], [], []>} : vector<16x64xf32>, vector<64x1xf32>, vector<16x1xf32> -> vector<16x1xf32>
    %cst_8 = arith.constant 0.000000e+00 : f32
    %9 = vector.broadcast %cst_8 : f32 to vector<16x1xf32>
    %10 = arith.maximumf %8, %9 : vector<16x1xf32>
    %cst_9 = arith.constant dense<0.000000e+00> : vector<64x1xf32>
    %11 = tpu.matmul %1, %10, %cst_9 {dimension_numbers = #tpu.dot_dimension_numbers<[1], [0], [0], [1], [0, 0, 1, 1], [], []>} : vector<64x16xf32>, vector<16x1xf32>, vector<64x1xf32> -> vector<64x1xf32>
    %12 = arith.negf %11 : vector<64x1xf32>
    %13 = math.exp %12 : vector<64x1xf32>
    %cst_10 = arith.constant 1.000000e+00 : f32
    %14 = vector.broadcast %cst_10 : f32 to vector<64x1xf32>
    %15 = arith.addf %14, %13 : vector<64x1xf32>
    %16 = arith.divf %14, %15 : vector<64x1xf32>
    %17 = vector.broadcast %16 : vector<64x1xf32> to vector<64x256xf32>
    %18 = arith.mulf %3, %17 : vector<64x256xf32>
    %c0_11 = arith.constant 0 : index
    %c0_12 = arith.constant 0 : index
    %c0_13 = arith.constant 0 : index
    %19 = vector.load %arg4[%c0_11, %c0_12, %c0_13] : memref<1x64x256xf32, #tpu.memory_space<vmem>>, vector<1x64x256xf32>
    %20 = vector.shape_cast %19 : vector<1x64x256xf32> to vector<64x256xf32>
    %21 = vector.shape_cast %18 : vector<64x256xf32> to vector<1x64x256xf32>
    tpu.vector_store %arg4[%c0_11, %c0_12, %c0_13], %21 {strides = array<i32>} : memref<1x64x256xf32, #tpu.memory_space<vmem>>, vector<1x64x256xf32>,
    return
  }
  func.func @transform_0(%arg0: i32) -> (i32, i32, i32) {
    %c0_i32 = arith.constant 0 : i32
    %c0_i32_0 = arith.constant 0 : i32
    %c0_i32_1 = arith.constant 0 : i32
    return %arg0, %c0_i32, %c0_i32_0 : i32, i32, i32
  }
  func.func @transform_1(%arg0: i32) -> (i32, i32) {
    %c0_i32 = arith.constant 0 : i32
    %c0_i32_0 = arith.constant 0 : i32
    %c0_i32_1 = arith.constant 0 : i32
    return %c0_i32, %c0_i32_0 : i32, i32
  }
  func.func @transform_2(%arg0: i32) -> (i32, i32) {
    %c0_i32 = arith.constant 0 : i32
    %c0_i32_0 = arith.constant 0 : i32
    %c0_i32_1 = arith.constant 0 : i32
    return %c0_i32, %c0_i32_0 : i32, i32
  }
  func.func @transform_3(%arg0: i32) -> (i32, i32, i32) {
    %c0_i32 = arith.constant 0 : i32
    %c0_i32_0 = arith.constant 0 : i32
    %c0_i32_1 = arith.constant 0 : i32
    return %arg0, %c0_i32, %c0_i32_0 : i32, i32, i32
  }
}

</mosaic_0001>

<llo_original>
// kernel: tpu_custom_call.1
$region0: #{tpu_custom_call.1}
  #allocation0 [shape = 'u32[]', space=smem, size = 0x4, offset = 0x4, fixed_abs, tag = 'smem constant byte address 0x4 - core index']
  #allocation1 [shape = 'u32[72,128]{1,0:T(1,128)}', space=vmem, size = 0x9000, scoped, tag = 'internal scratch']
  %s0 = inlined_call_operand.hbm [shape: f32[2,64,256], index: 0, kind: input, shape index: {}]
  %s1 = inlined_call_operand.vmem [shape: f32[16,64], index: 1, kind: input, shape index: {}]
  %s2 = inlined_call_operand.vmem [shape: f32[64,16], index: 2, kind: input, shape index: {}]
  %s3 = inlined_call_operand.hbm [shape: f32[2,64,256], index: 3, kind: output, shape index: {}]
  %s4 = sld [smem:[#allocation0]]
  $region49: #{tpu_custom_call.1} parent=0
    _
  %s6 = ssub.s32 1, %s4
  %s7 = scalar_select 0, %s6, %s4
  $region1: #{tpu_custom_call.1} parent=0
    #allocation2 [shape = 'u8[131072]{0}', space=vmem, size = 0x20000, scoped, tag = 'input window, operand 0']
    #allocation3 [shape = 's32[2]{0}', space=sflag, size = 0x8, scoped, tag = 'scoped memory for tpu_custom_call.1']
    #allocation4 [shape = 's32[2]{0}', space=sflag, size = 0x8, scoped, tag = 'scoped memory for tpu_custom_call.1']
    #allocation5 [shape = 'u8[131072]{0}', space=vmem, size = 0x20000, scoped, tag = 'output window, operand 0']
    %8 = vsyncpa [#allocation3], 0
    %s9 = scalar_lea.sflag [#allocation3], 1
    %10 = vsyncpa %s9, 0
    %11 = vsyncpa [#allocation4], 0
    %s12 = scalar_lea.sflag [#allocation4], 1
    %13 = vsyncpa %s12, 0
    loop: start=0, step=1, limit=4
    $region2: #{tpu_custom_call.1} parent=1 // loop_pre_header
      _
    $region3: #{tpu_custom_call.1} parent=1 // loop_header
      %s15 = sphi 0, %s19
      %p16 = scmp.ge.s32.totalorder %s15, 4
      %s25 = sphi 0, %s27
      %s28 = sphi 0, %s25
      %s29 = sphi 0, %s28
      %s45 = sphi 0, %s29
      %s49 = sphi 0, %s49
      %s51 = sphi 0, %s49
      %s52 = sphi 0, %s51
      %s66 = sphi 0, %s52
      %s70 = sphi 0, %s70
      %s72 = sphi 0, %s70
      %s73 = sphi 0, %s72
      %s87 = sphi 0, %s73
      %s93 = sphi 0, %s95
      %s96 = sphi 0, %s93
      %s97 = sphi 0, %s96
      %s113 = sphi 0, %s97
    $region4: #{tpu_custom_call.1} parent=1 // loop_header_branch
      %18 = sbr.rel (%p16) target = $region8
    $region5: #{tpu_custom_call.1} parent=1 // loop_body
      %s20 = ssub.s32 %s15, 1
      %s21 = ssub.s32 %s15, 2
      %s22 = sadd.s32 %s15, 1
      %s23 = ssub.s32 %s15, %s22
      %p24 = scmp.eq.s32.totalorder %s23, 0
      %s26 = sadd.s32 %s25, 1
      %s27 = scalar_select %p24, %s25, %s26
      %p30 = pneg %p24
      %p31 = scmp.eq.s32.totalorder %s15, 1
      %p32 = por %p30, %p31
      %p33 = scmp.ne.s32.totalorder %s25, %s28
      %p34 = scmp.eq.s32.totalorder %s15, 0
      %p35 = por %p33, %p34
      %p36 = scmp.ne.s32.totalorder %s25, %s28
      %p37 = scmp.eq.s32.totalorder %s20, 1
      %p38 = por %p36, %p37
      %p39 = scmp.ne.s32.totalorder %s28, %s29
      %p40 = scmp.eq.s32.totalorder %s20, 0
      %p41 = por %p39, %p40
      %p42 = scmp.ne.s32.totalorder %s28, %s29
      %p43 = scmp.eq.s32.totalorder %s21, 1
      %p44 = por %p42, %p43
      %p46 = scmp.ne.s32.totalorder %s29, %s45
      %p47 = scmp.eq.s32.totalorder %s21, 0
      %p48 = por %p46, %p47
      %s50 = sadd.s32 %s49, 1
      %p53 = scmp.eq.s32.totalorder %s15, 1
      %p54 = scmp.ne.s32.totalorder %s49, %s51
      %p55 = scmp.eq.s32.totalorder %s15, 0
      %p56 = por %p54, %p55
      %p57 = scmp.ne.s32.totalorder %s49, %s51
      %p58 = scmp.eq.s32.totalorder %s20, 1
      %p59 = por %p57, %p58
      %p60 = scmp.ne.s32.totalorder %s51, %s52
      %p61 = scmp.eq.s32.totalorder %s20, 0
      %p62 = por %p60, %p61
      %p63 = scmp.ne.s32.totalorder %s51, %s52
      %p64 = scmp.eq.s32.totalorder %s21, 1
      %p65 = por %p63, %p64
      %p67 = scmp.ne.s32.totalorder %s52, %s66
      %p68 = scmp.eq.s32.totalorder %s21, 0
      %p69 = por %p67, %p68
      %s71 = sadd.s32 %s70, 1
      %p74 = scmp.eq.s32.totalorder %s15, 1
      %p75 = scmp.ne.s32.totalorder %s70, %s72
      %p76 = scmp.eq.s32.totalorder %s15, 0
      %p77 = por %p75, %p76
      %p78 = scmp.ne.s32.totalorder %s70, %s72
      %p79 = scmp.eq.s32.totalorder %s20, 1
      %p80 = por %p78, %p79
      %p81 = scmp.ne.s32.totalorder %s72, %s73
      %p82 = scmp.eq.s32.totalorder %s20, 0
      %p83 = por %p81, %p82
      %p84 = scmp.ne.s32.totalorder %s72, %s73
      %p85 = scmp.eq.s32.totalorder %s21, 1
      %p86 = por %p84, %p85
      %p88 = scmp.ne.s32.totalorder %s73, %s87
      %p89 = scmp.eq.s32.totalorder %s21, 0
      %p90 = por %p88, %p89
      %s91 = ssub.s32 %s15, %s22
      %p92 = scmp.eq.s32.totalorder %s91, 0
      %s94 = sadd.s32 %s93, 1
      %s95 = scalar_select %p92, %s93, %s94
      %p98 = pneg %p92
      %p99 = scmp.eq.s32.totalorder %s15, 1
      %p100 = por %p98, %p99
      %p101 = scmp.ne.s32.totalorder %s93, %s96
      %p102 = scmp.eq.s32.totalorder %s15, 0
      %p103 = por %p101, %p102
      %p104 = scmp.ne.s32.totalorder %s93, %s96
      %p105 = scmp.eq.s32.totalorder %s20, 1
      %p106 = por %p104, %p105
      %p107 = scmp.ne.s32.totalorder %s96, %s97
      %p108 = scmp.eq.s32.totalorder %s20, 0
      %p109 = por %p107, %p108
      %p110 = scmp.ne.s32.totalorder %s96, %s97
      %p111 = scmp.eq.s32.totalorder %s21, 1
      %p112 = por %p110, %p111
      %p114 = scmp.ne.s32.totalorder %s97, %s113
      %p115 = scmp.eq.s32.totalorder %s21, 0
      %p116 = por %p114, %p115
      %p117 = scmp.le.s32.totalorder 1, %s15
      %p118 = scmp.lt.s32.totalorder %s15, 3
      %p119 = pnand %p117, %p118
      %p120 = pneg %p119
      // Predicated region
      $region9: #{tpu_custom_call.1} parent=5 // pred_check
        _
      $region10: #{tpu_custom_call.1} parent=5 // pred_check_branch
        %122 = sbr.rel (%p119) target = $region12
      $region11: #{tpu_custom_call.1} parent=5 // pred_region
        %s123 = ssub.s32 %s15, 1
        // Predicated region
        $region13: #{tpu_custom_call.1} parent=11 // pred_check
          %p124 = pneg %p62
        $region14: #{tpu_custom_call.1} parent=11 // pred_check_branch
          %126 = sbr.rel (%p124) target = $region16
        $region15: #{tpu_custom_call.1} parent=11 // pred_region
          _
        $region16: #{tpu_custom_call.1} parent=11 // pred_fallthru
          _
        // Predicated region
        $region17: #{tpu_custom_call.1} parent=11 // pred_check
          %p127 = pneg %p83
        $region18: #{tpu_custom_call.1} parent=11 // pred_check_branch
          %129 = sbr.rel (%p127) target = $region20
        $region19: #{tpu_custom_call.1} parent=11 // pred_region
          _
        $region20: #{tpu_custom_call.1} parent=11 // pred_fallthru
          _
      $region12: #{tpu_custom_call.1} parent=5 // pred_fallthru
        _
      %p130 = scmp.lt.s32.totalorder %s15, 2
      // Predicated region
      $region21: #{tpu_custom_call.1} parent=5 // pred_check
        %p131 = pneg %p130
      $region22: #{tpu_custom_call.1} parent=5 // pred_check_branch
        %133 = sbr.rel (%p131) target = $region24
      $region23: #{tpu_custom_call.1} parent=5 // pred_region
        // Predicated region
        $region25: #{tpu_custom_call.1} parent=23 // pred_check
          %p134 = pneg %p35
        $region26: #{tpu_custom_call.1} parent=23 // pred_check_branch
          %136 = sbr.rel (%p134) target = $region28
        $region27: #{tpu_custom_call.1} parent=23 // pred_region
          %s137 = sand.u32 %s25, 1
          %s138 = scalar_lea.sflag [#allocation3], %s137
          %s139 = sand.u32 %s25, 1
          %s140 = smul.addr %s139, 128
          %s141 = scalar_lea.vmem [#allocation2], %s140
          %143 = vsyncadd %s138, 0
          %s144 = smul.addr %s15, 16
          %s145 = smul.addr %s144, 8
          %s146 = scalar_lea.hbm %s0, %s145
          %s147 = sshll.u32 %s146, 4
          %s148 = int_to_ptr.hbm [resolvable:$true] %s147
          %s149 = sshll.u32 %s141, 4
          %s150 = int_to_ptr.vmem [resolvable:$true] %s149
          %155 = dma.hbm_to_vmem [thread:$0]  %s148, 2048, %s150, %s138, 256, 256, 16
        $region28: #{tpu_custom_call.1} parent=23 // pred_fallthru
          _
      $region24: #{tpu_custom_call.1} parent=5 // pred_fallthru
        _
      %p156 = scmp.le.s32.totalorder 1, %s15
      %p157 = scmp.lt.s32.totalorder %s15, 3
      %p158 = pnand %p156, %p157
      %p159 = pneg %p158
      // Predicated region
      $region29: #{tpu_custom_call.1} parent=5 // pred_check
        _
      $region30: #{tpu_custom_call.1} parent=5 // pred_check_branch
        %161 = sbr.rel (%p158) target = $region32
      $region31: #{tpu_custom_call.1} parent=5 // pred_region
        %s162 = ssub.s32 %s15, 1
        %s163 = sand.u32 %s28, 1
        %s164 = scalar_lea.sflag [#allocation3], %s163
        %s165 = sand.u32 %s28, 1
        %s166 = smul.addr %s165, 128
        %s167 = scalar_lea.vmem [#allocation2], %s166
        // Predicated region
        $region33: #{tpu_custom_call.1} parent=31 // pred_check
          %p168 = pneg %p41
        $region34: #{tpu_custom_call.1} parent=31 // pred_check_branch
          %170 = sbr.rel (%p168) target = $region36
        $region35: #{tpu_custom_call.1} parent=31 // pred_region
          %172 = dma.done %s164, 2048
        $region36: #{tpu_custom_call.1} parent=31 // pred_fallthru
          _
        %s173 = sand.u32 %s28, 1
        %s174 = scalar_lea.sflag [#allocation3], %s173
        %s175 = sand.u32 %s28, 1
        %s176 = smul.addr %s175, 128
        %s177 = scalar_lea.vmem [#allocation2], %s176
        %p178 = pneg %p41
        %p179 = pneg %p38
        %p180 = pneg %p62
        %p181 = pneg %p59
        %p182 = pneg %p83
        %p183 = pneg %p80
        %p184 = pneg %p109
        %p185 = pneg %p106
        %s186 = sand.u32 %s96, 1
        %s187 = scalar_lea.sflag [#allocation4], %s186
        %s188 = sand.u32 %s96, 1
        %s189 = smul.addr %s188, 128
        %s190 = scalar_lea.vmem [#allocation5], %s189
        %v191 = vld [vmem:[%s1] sm:$0xff]
        %v192 = vld [vmem:[%s1 + $0x8] sm:$0xff]
        %v193 = vld [vmem:[%s2] sm:$0xff]
        %v194 = vld [vmem:[%s2 + $0x8] sm:$0xff]
        %v195 = vld [vmem:[%s2 + $0x10] sm:$0xff]
        %v196 = vld [vmem:[%s2 + $0x18] sm:$0xff]
        %v197 = vld [vmem:[%s2 + $0x20] sm:$0xff]
        %v198 = vld [vmem:[%s2 + $0x28] sm:$0xff]
        %v199 = vld [vmem:[%s2 + $0x30] sm:$0xff]
        %v200 = vld [vmem:[%s2 + $0x38] sm:$0xff]
        %v201 = vld [vmem:[%s167] sm:$0xff]
        %v202 = vld [vmem:[%s167 + $0x8] sm:$0xff]
        %v203 = vld [vmem:[%s167 + $0x10] sm:$0xff]
        %v204 = vld [vmem:[%s167 + $0x18] sm:$0xff]
        %v205 = vld [vmem:[%s167 + $0x20] sm:$0xff]
        %v206 = vld [vmem:[%s167 + $0x28] sm:$0xff]
        %v207 = vld [vmem:[%s167 + $0x30] sm:$0xff]
        %v208 = vld [vmem:[%s167 + $0x38] sm:$0xff]
        %v209 = vld [vmem:[%s167 + $0x40] sm:$0xff]
        %v210 = vld [vmem:[%s167 + $0x48] sm:$0xff]
        %v211 = vld [vmem:[%s167 + $0x50] sm:$0xff]
        %v212 = vld [vmem:[%s167 + $0x58] sm:$0xff]
        %v213 = vld [vmem:[%s167 + $0x60] sm:$0xff]
        %v214 = vld [vmem:[%s167 + $0x68] sm:$0xff]
        %v215 = vld [vmem:[%s167 + $0x70] sm:$0xff]
        %v216 = vld [vmem:[%s167 + $0x78] sm:$0xff]
        %v217 = vadd.f32 %v201, %v202
        %218 = vadd.xlane.f32.xlu0 %v217
        %v219 = vpop.xlane.xlu0 %218
        %v220 = vadd.f32 %v203, %v204
        %221 = vadd.xlane.f32.xlu0 %v220
        %v222 = vpop.xlane.xlu0 %221
        %v223 = vadd.f32 %v205, %v206
        %224 = vadd.xlane.f32.xlu0 %v223
        %v225 = vpop.xlane.xlu0 %224
        %v226 = vadd.f32 %v207, %v208
        %227 = vadd.xlane.f32.xlu0 %v226
        %v228 = vpop.xlane.xlu0 %227
        %v229 = vadd.f32 %v209, %v210
        %230 = vadd.xlane.f32.xlu0 %v229
        %v231 = vpop.xlane.xlu0 %230
        %v232 = vadd.f32 %v211, %v212
        %233 = vadd.xlane.f32.xlu0 %v232
        %v234 = vpop.xlane.xlu0 %233
        %v235 = vadd.f32 %v213, %v214
        %236 = vadd.xlane.f32.xlu0 %v235
        %v237 = vpop.xlane.xlu0 %236
        %v238 = vadd.f32 %v215, %v216
        %239 = vadd.xlane.f32.xlu0 %v238
        %v240 = vpop.xlane.xlu0 %239
        %v241 = vmul.f32 %v219, 0.00390625
        %v242 = vmul.f32 %v222, 0.00390625
        %v243 = vmul.f32 %v225, 0.00390625
        %v244 = vmul.f32 %v228, 0.00390625
        %v245 = vmul.f32 %v231, 0.00390625
        %v246 = vmul.f32 %v234, 0.00390625
        %v247 = vmul.f32 %v237, 0.00390625
        %v248 = vmul.f32 %v240, 0.00390625
        %vm249 = vcmask 523264
        %v251 = vsel %vm249, %v191, 0
        %v254 = vsel %vm249, %v192, 0
        %256 = vmatpush.msra.mxu0 0.0
        %257 = vmatpush.msra.mxu0 0.0
        %258 = vmatpush.msra.mxu0 0.0
        %259 = vmatpush.msra.mxu0 0.0
        %260 = vmatpush.msra.mxu0 0.0
        %261 = vmatpush.msra.mxu0 0.0
        %262 = vmatpush.msra.mxu0 0.0
        %263 = vmatpush.msra.mxu0 0.0
        %264 = vmatpush.msra.mxu0 %v248
        %265 = vmatpush.msra.mxu0 %v247
        %266 = vmatpush.msra.mxu0 %v246
        %267 = vmatpush.msra.mxu0 %v245
        %268 = vmatpush.msra.mxu0 %v244
        %269 = vmatpush.msra.mxu0 %v243
        %270 = vmatpush.msra.mxu0 %v242
        %271 = vmatpush.msra.mxu0 %v241
        %272 = vmatmul.f32.gmra.mxu0 %v251
        %v273 = vpop.f32.mrf.mxu0
        %v274 = vadd.f32 0.0, %v273
        %275 = vmatmul.f32.gmra.mxu0 %v254
        %v276 = vpop.f32.mrf.mxu0
        %v277 = vadd.f32 0.0, %v276
        %278 = vdwg.mxu0
        %v279 = vmax.f32 %v274, 0.0
        %v280 = vmax.f32 %v277, 0.0
        %vm281 = vcmask 130048
        %v283 = vsel %vm281, %v193, 0
        %v286 = vsel %vm281, %v194, 0
        %v289 = vsel %vm281, %v195, 0
        %v292 = vsel %vm281, %v196, 0
        %v295 = vsel %vm281, %v197, 0
        %v298 = vsel %vm281, %v198, 0
        %v301 = vsel %vm281, %v199, 0
        %v304 = vsel %vm281, %v200, 0
        %306 = vmatpush.msra.mxu0 0.0
        %307 = vmatpush.msra.mxu0 0.0
        %308 = vmatpush.msra.mxu0 0.0
        %309 = vmatpush.msra.mxu0 0.0
        %310 = vmatpush.msra.mxu0 0.0
        %311 = vmatpush.msra.mxu0 0.0
        %312 = vmatpush.msra.mxu0 0.0
        %313 = vmatpush.msra.mxu0 0.0
        %314 = vmatpush.msra.mxu0 0.0
        %315 = vmatpush.msra.mxu0 0.0
        %316 = vmatpush.msra.mxu0 0.0
        %317 = vmatpush.msra.mxu0 0.0
        %318 = vmatpush.msra.mxu0 0.0
        %319 = vmatpush.msra.mxu0 0.0
        %320 = vmatpush.msra.mxu0 %v280
        %321 = vmatpush.msra.mxu0 %v279
        %322 = vmatmul.f32.gmra.mxu0 %v283
        %v323 = vpop.f32.mrf.mxu0
        %v324 = vadd.f32 0.0, %v323
        %325 = vmatmul.f32.gmra.mxu0 %v286
        %v326 = vpop.f32.mrf.mxu0
        %v327 = vadd.f32 0.0, %v326
        %328 = vmatmul.f32.gmra.mxu0 %v289
        %v329 = vpop.f32.mrf.mxu0
        %v330 = vadd.f32 0.0, %v329
        %331 = vmatmul.f32.gmra.mxu0 %v292
        %v332 = vpop.f32.mrf.mxu0
        %v333 = vadd.f32 0.0, %v332
        %334 = vmatmul.f32.gmra.mxu0 %v295
        %v335 = vpop.f32.mrf.mxu0
        %v336 = vadd.f32 0.0, %v335
        %337 = vmatmul.f32.gmra.mxu0 %v298
        %v338 = vpop.f32.mrf.mxu0
        %v339 = vadd.f32 0.0, %v338
        %340 = vmatmul.f32.gmra.mxu0 %v301
        %v341 = vpop.f32.mrf.mxu0
        %v342 = vadd.f32 0.0, %v341
        %343 = vmatmul.f32.gmra.mxu0 %v304
        %v344 = vpop.f32.mrf.mxu0
        %v345 = vadd.f32 0.0, %v344
        %346 = vdwg.mxu0
        %v347 = vxor.u32 %v324, 2147483648
        %v348 = vxor.u32 %v327, 2147483648
        %v349 = vxor.u32 %v330, 2147483648
        %v350 = vxor.u32 %v333, 2147483648
        %v351 = vxor.u32 %v336, 2147483648
        %v352 = vxor.u32 %v339, 2147483648
        %v353 = vxor.u32 %v342, 2147483648
        %v354 = vxor.u32 %v345, 2147483648
        %v355 = vmul.f32 %v347, 1.442695
        %v356 = vpow.pop %v355
        %v357 = vmul.f32 %v348, 1.442695
        %v358 = vpow.pop %v357
        %v359 = vmul.f32 %v349, 1.442695
        %v360 = vpow.pop %v359
        %v361 = vmul.f32 %v350, 1.442695
        %v362 = vpow.pop %v361
        %v363 = vmul.f32 %v351, 1.442695
        %v364 = vpow.pop %v363
        %v365 = vmul.f32 %v352, 1.442695
        %v366 = vpow.pop %v365
        %v367 = vmul.f32 %v353, 1.442695
        %v368 = vpow.pop %v367
        %v369 = vmul.f32 %v354, 1.442695
        %v370 = vpow.pop %v369
        %v371 = vadd.f32 %v356, 1.0
        %v372 = vadd.f32 %v358, 1.0
        %v373 = vadd.f32 %v360, 1.0
        %v374 = vadd.f32 %v362, 1.0
        %v375 = vadd.f32 %v364, 1.0
        %v376 = vadd.f32 %v366, 1.0
        %v377 = vadd.f32 %v368, 1.0
        %v378 = vadd.f32 %v370, 1.0
        %v379 = vrcp.pop %v371
        %v380 = vmul.f32 %v371, %v379
        %v381 = vsub.f32 1.0, %v380
        %v382 = vmul.f32 %v379, %v381
        %v383 = vadd.f32 %v379, %v382
        %vm384 = vweird.f32 %v371
        %vm385 = vweird.f32 %v379
        %vm386 = vmor %vm384, %vm385
        %v387 = vsel %vm386, %v379, %v383
        %v388 = vand.u32 2147483647, %v371
        %vm389 = vcmp.eq.f32.partialorder %v388, 8.507059e+37
        %v390 = vand.u32 %v371, 2147483648
        %v391 = vor.u32 1.1754944e-38, %v390
        %v392 = vsel %vm389, %v391, %v387
        %v393 = vmul.f32 1.0, %v392
        %v394 = vrcp.pop %v372
        %v395 = vmul.f32 %v372, %v394
        %v396 = vsub.f32 1.0, %v395
        %v397 = vmul.f32 %v394, %v396
        %v398 = vadd.f32 %v394, %v397
        %vm399 = vweird.f32 %v372
        %vm400 = vweird.f32 %v394
        %vm401 = vmor %vm399, %vm400
        %v402 = vsel %vm401, %v394, %v398
        %v403 = vand.u32 2147483647, %v372
        %vm404 = vcmp.eq.f32.partialorder %v403, 8.507059e+37
        %v405 = vand.u32 %v372, 2147483648
        %v406 = vor.u32 1.1754944e-38, %v405
        %v407 = vsel %vm404, %v406, %v402
        %v408 = vmul.f32 1.0, %v407
        %v409 = vrcp.pop %v373
        %v410 = vmul.f32 %v373, %v409
        %v411 = vsub.f32 1.0, %v410
        %v412 = vmul.f32 %v409, %v411
        %v413 = vadd.f32 %v409, %v412
        %vm414 = vweird.f32 %v373
        %vm415 = vweird.f32 %v409
        %vm416 = vmor %vm414, %vm415
        %v417 = vsel %vm416, %v409, %v413
        %v418 = vand.u32 2147483647, %v373
        %vm419 = vcmp.eq.f32.partialorder %v418, 8.507059e+37
        %v420 = vand.u32 %v373, 2147483648
        %v421 = vor.u32 1.1754944e-38, %v420
        %v422 = vsel %vm419, %v421, %v417
        %v423 = vmul.f32 1.0, %v422
        %v424 = vrcp.pop %v374
        %v425 = vmul.f32 %v374, %v424
        %v426 = vsub.f32 1.0, %v425
        %v427 = vmul.f32 %v424, %v426
        %v428 = vadd.f32 %v424, %v427
        %vm429 = vweird.f32 %v374
        %vm430 = vweird.f32 %v424
        %vm431 = vmor %vm429, %vm430
        %v432 = vsel %vm431, %v424, %v428
        %v433 = vand.u32 2147483647, %v374
        %vm434 = vcmp.eq.f32.partialorder %v433, 8.507059e+37
        %v435 = vand.u32 %v374, 2147483648
        %v436 = vor.u32 1.1754944e-38, %v435
        %v437 = vsel %vm434, %v436, %v432
        %v438 = vmul.f32 1.0, %v437
        %v439 = vrcp.pop %v375
        %v440 = vmul.f32 %v375, %v439
        %v441 = vsub.f32 1.0, %v440
        %v442 = vmul.f32 %v439, %v441
        %v443 = vadd.f32 %v439, %v442
        %vm444 = vweird.f32 %v375
        %vm445 = vweird.f32 %v439
        %vm446 = vmor %vm444, %vm445
        %v447 = vsel %vm446, %v439, %v443
        %v448 = vand.u32 2147483647, %v375
        %vm449 = vcmp.eq.f32.partialorder %v448, 8.507059e+37
        %v450 = vand.u32 %v375, 2147483648
        %v451 = vor.u32 1.1754944e-38, %v450
        %v452 = vsel %vm449, %v451, %v447
        %v453 = vmul.f32 1.0, %v452
        %v454 = vrcp.pop %v376
        %v455 = vmul.f32 %v376, %v454
        %v456 = vsub.f32 1.0, %v455
        %v457 = vmul.f32 %v454, %v456
        %v458 = vadd.f32 %v454, %v457
        %vm459 = vweird.f32 %v376
        %vm460 = vweird.f32 %v454
        %vm461 = vmor %vm459, %vm460
        %v462 = vsel %vm461, %v454, %v458
        %v463 = vand.u32 2147483647, %v376
        %vm464 = vcmp.eq.f32.partialorder %v463, 8.507059e+37
        %v465 = vand.u32 %v376, 2147483648
        %v466 = vor.u32 1.1754944e-38, %v465
        %v467 = vsel %vm464, %v466, %v462
        %v468 = vmul.f32 1.0, %v467
        %v469 = vrcp.pop %v377
        %v470 = vmul.f32 %v377, %v469
        %v471 = vsub.f32 1.0, %v470
        %v472 = vmul.f32 %v469, %v471
        %v473 = vadd.f32 %v469, %v472
        %vm474 = vweird.f32 %v377
        %vm475 = vweird.f32 %v469
        %vm476 = vmor %vm474, %vm475
        %v477 = vsel %vm476, %v469, %v473
        %v478 = vand.u32 2147483647, %v377
        %vm479 = vcmp.eq.f32.partialorder %v478, 8.507059e+37
        %v480 = vand.u32 %v377, 2147483648
        %v481 = vor.u32 1.1754944e-38, %v480
        %v482 = vsel %vm479, %v481, %v477
        %v483 = vmul.f32 1.0, %v482
        %v484 = vrcp.pop %v378
        %v485 = vmul.f32 %v378, %v484
        %v486 = vsub.f32 1.0, %v485
        %v487 = vmul.f32 %v484, %v486
        %v488 = vadd.f32 %v484, %v487
        %vm489 = vweird.f32 %v378
        %vm490 = vweird.f32 %v484
        %vm491 = vmor %vm489, %vm490
        %v492 = vsel %vm491, %v484, %v488
        %v493 = vand.u32 2147483647, %v378
        %vm494 = vcmp.eq.f32.partialorder %v493, 8.507059e+37
        %v495 = vand.u32 %v378, 2147483648
        %v496 = vor.u32 1.1754944e-38, %v495
        %v497 = vsel %vm494, %v496, %v492
        %v498 = vmul.f32 1.0, %v497
        %500 = vset.pattern.permute.xlu0 0
        %501 = vperm.xlu0 %500, %v393
        %v502 = vpop.permute.xlu0 %501
        %505 = vset.pattern.permute.xlu0 0
        %506 = vperm.xlu0 %505, %v408
        %v507 = vpop.permute.xlu0 %506
        %510 = vset.pattern.permute.xlu0 0
        %511 = vperm.xlu0 %510, %v423
        %v512 = vpop.permute.xlu0 %511
        %515 = vset.pattern.permute.xlu0 0
        %516 = vperm.xlu0 %515, %v438
        %v517 = vpop.permute.xlu0 %516
        %520 = vset.pattern.permute.xlu0 0
        %521 = vperm.xlu0 %520, %v453
        %v522 = vpop.permute.xlu0 %521
        %525 = vset.pattern.permute.xlu0 0
        %526 = vperm.xlu0 %525, %v468
        %v527 = vpop.permute.xlu0 %526
        %530 = vset.pattern.permute.xlu0 0
        %531 = vperm.xlu0 %530, %v483
        %v532 = vpop.permute.xlu0 %531
        %535 = vset.pattern.permute.xlu0 0
        %536 = vperm.xlu0 %535, %v498
        %v537 = vpop.permute.xlu0 %536
        %v539 = vmul.f32 %v201, %v502
        %v540 = vmul.f32 %v202, %v502
        %v541 = vmul.f32 %v203, %v507
        %v542 = vmul.f32 %v204, %v507
        %v543 = vmul.f32 %v205, %v512
        %v544 = vmul.f32 %v206, %v512
        %v545 = vmul.f32 %v207, %v517
        %v546 = vmul.f32 %v208, %v517
        %v547 = vmul.f32 %v209, %v522
        %v548 = vmul.f32 %v210, %v522
        %v549 = vmul.f32 %v211, %v527
        %v550 = vmul.f32 %v212, %v527
        %v551 = vmul.f32 %v213, %v532
        %v552 = vmul.f32 %v214, %v532
        %v553 = vmul.f32 %v215, %v537
        %v554 = vmul.f32 %v216, %v537
        %555 = vst [vmem:[%s190] sm:$0xff] %v539
        %556 = vst [vmem:[%s190 + $0x8] sm:$0xff] %v540
        %557 = vst [vmem:[%s190 + $0x10] sm:$0xff] %v541
        %558 = vst [vmem:[%s190 + $0x18] sm:$0xff] %v542
        %559 = vst [vmem:[%s190 + $0x20] sm:$0xff] %v543
        %560 = vst [vmem:[%s190 + $0x28] sm:$0xff] %v544
        %561 = vst [vmem:[%s190 + $0x30] sm:$0xff] %v545
        %562 = vst [vmem:[%s190 + $0x38] sm:$0xff] %v546
        %563 = vst [vmem:[%s190 + $0x40] sm:$0xff] %v547
        %564 = vst [vmem:[%s190 + $0x48] sm:$0xff] %v548
        %565 = vst [vmem:[%s190 + $0x50] sm:$0xff] %v549
        %566 = vst [vmem:[%s190 + $0x58] sm:$0xff] %v550
        %567 = vst [vmem:[%s190 + $0x60] sm:$0xff] %v551
        %568 = vst [vmem:[%s190 + $0x68] sm:$0xff] %v552
        %569 = vst [vmem:[%s190 + $0x70] sm:$0xff] %v553
        %570 = vst [vmem:[%s190 + $0x78] sm:$0xff] %v554
        %s571 = sand.u32 %s96, 1
        %s572 = scalar_lea.sflag [#allocation4], %s571
        %s573 = sand.u32 %s96, 1
        %s574 = smul.addr %s573, 128
        %s575 = scalar_lea.vmem [#allocation5], %s574
        // Predicated region
        $region37: #{tpu_custom_call.1} parent=31 // pred_check
          %p576 = pneg %p106
        $region38: #{tpu_custom_call.1} parent=31 // pred_check_branch
          %578 = sbr.rel (%p576) target = $region40
        $region39: #{tpu_custom_call.1} parent=31 // pred_region
          %580 = vsyncadd %s572, 0
          %s581 = smul.addr %s20, 16
          %s582 = smul.addr %s581, 8
          %s583 = scalar_lea.hbm %s3, %s582
          %s584 = sshll.u32 %s575, 4
          %s585 = int_to_ptr.vmem [resolvable:$true] %s584
          %s586 = sshll.u32 %s583, 4
          %s587 = int_to_ptr.hbm [resolvable:$true] %s586
          %592 = dma.vmem_to_hbm [thread:$0]  %s585, 2048, %s587, %s572, 256, 256, 16
        $region40: #{tpu_custom_call.1} parent=31 // pred_fallthru
          _
      $region32: #{tpu_custom_call.1} parent=5 // pred_fallthru
        _
      %p593 = scmp.le.s32.totalorder 2, %s15
      // Predicated region
      $region41: #{tpu_custom_call.1} parent=5 // pred_check
        %p594 = pneg %p593
      $region42: #{tpu_custom_call.1} parent=5 // pred_check_branch
        %596 = sbr.rel (%p594) target = $region44
      $region43: #{tpu_custom_call.1} parent=5 // pred_region
        %s597 = ssub.s32 %s15, 2
        // Predicated region
        $region45: #{tpu_custom_call.1} parent=43 // pred_check
          %p598 = pneg %p112
        $region46: #{tpu_custom_call.1} parent=43 // pred_check_branch
          %600 = sbr.rel (%p598) target = $region48
        $region47: #{tpu_custom_call.1} parent=43 // pred_region
          %s601 = sand.u32 %s97, 1
          %s602 = scalar_lea.sflag [#allocation4], %s601
          %s603 = sand.u32 %s97, 1
          %s604 = smul.addr %s603, 128
          %s605 = scalar_lea.vmem [#allocation5], %s604
          %607 = dma.done %s602, 2048
        $region48: #{tpu_custom_call.1} parent=43 // pred_fallthru
          _
      $region44: #{tpu_custom_call.1} parent=5 // pred_fallthru
        _
    $region6: #{tpu_custom_call.1} parent=1 // loop_footer
      %s19 = sadd.s32 1, %s15
    $region7: #{tpu_custom_call.1} parent=1 // loop_footer_branch
      %14 = sbr.rel target = $region3
    $region8: #{tpu_custom_call.1} parent=1 // loop_exit
      _
    %608 = vsyncpa [#allocation3], 1
    %s609 = scalar_lea.sflag [#allocation3], 1
    %610 = vsyncpa %s609, 1
    %611 = vsyncpa [#allocation4], 1
    %s612 = scalar_lea.sflag [#allocation4], 1
    %613 = vsyncpa %s612, 1

</llo_original>
